<compile_context>
chip_gen: v6e
topology: v6e:2x2x1
jax: 0.10.0
libtpu: 0.0.40
codegen_flags: <defaults>
</compile_context>

<pallas_src>
import functools
import math

import jax
import jax.numpy as jnp
from jax.experimental import pallas as pl
from jax.experimental.pallas import tpu as pltpu


# ----------------------------------------------------------------------------
# shared math helpers (pure jnp — traceable both inside and outside the kernel)
# ----------------------------------------------------------------------------
def _layer_norm(x, gamma, beta, eps=1e-12):
    mean = jnp.mean(x, axis=-1, keepdims=True)
    var = jnp.mean(jnp.square(x - mean), axis=-1, keepdims=True)
    return (x - mean) * jax.lax.rsqrt(var + eps) * gamma + beta


def _supports_bf16_transcendentals():
    """bf16 EUP/VPU paths exist on v6e/v7x, not on v5e and older."""
    try:
        kind = jax.devices()[0].device_kind.lower()
    except Exception:
        return False
    return not any(v in kind for v in ("v2", "v3", "v4", "v5"))


# ----------------------------------------------------------------------------
# Pallas kernel: single transformer encoder layer
# (one grid step == BT batch elements; weights resident in VMEM via constant
#  index maps; token-parallel matmuls on the merged (BT*S, H) token matrix)
# ----------------------------------------------------------------------------
def encoder_kernel(
    x_ref,        # (BT, S, H) f32   embedded + layer-normed input block
    bias_ref,     # (BT, S)    f32   additive attention bias (0 or -1e9)
    wqkv_ref,     # (H, 3H) bf16 if fuse_qkv else (3, H, H) bf16 (q pre-scaled)
    wo_ref,       # (H, H)  bf16
    ln1g_ref, ln1b_ref,          # (1, H) f32
    w1_ref, b1_ref,              # (H, I) bf16, (1, I) f32
    w2_ref, b2_ref,              # (I, H) bf16, (1, H) f32
    ln2g_ref, ln2b_ref,          # (1, H) f32
    seq_ref,      # (BT, S, H) f32  output block
    *, batch_tile, seq_len, hidden, fuse_qkv, bf16_eup,
):
    BT, S, H = batch_tile, seq_len, hidden

    # merge batch into the token (sublane) axis — whole-tile split, layout no-op
    x = x_ref[...].reshape(BT * S, H)            # (BT*S, H) f32
    xb = x.astype(jnp.bfloat16)

    # --- QKV projection -------------------------------------------------------
    # 1/sqrt(H) is already folded into the q weight at prep time.
    if fuse_qkv:
        # single wide MXU push; H % 128 == 0 so q/k/v slices are lane-aligned
        qkv = jnp.dot(xb, wqkv_ref[...],
                      preferred_element_type=jnp.float32).astype(jnp.bfloat16)
        q, k, v = qkv[:, :H], qkv[:, H:2 * H], qkv[:, 2 * H:]
    else:
        # toy H (not a multiple of 128): three dots, no lane-relayout slices
        q = jnp.dot(xb, wqkv_ref[0],
                    preferred_element_type=jnp.float32).astype(jnp.bfloat16)
        k = jnp.dot(xb, wqkv_ref[1],
                    preferred_element_type=jnp.float32).astype(jnp.bfloat16)
        v = jnp.dot(xb, wqkv_ref[2],
                    preferred_element_type=jnp.float32).astype(jnp.bfloat16)

    # --- per-batch (S, S) attention (statically unrolled, BT is small) --------
    bias = bias_ref[...]                         # (BT, S) f32
    ctx_parts = []
    for b in range(BT):
        lo = b * S
        qb, kb, vb = q[lo:lo + S, :], k[lo:lo + S, :], v[lo:lo + S, :]
        s_b = jax.lax.dot_general(                 # q @ k^T, contract over H
            qb, kb, dimension_numbers=(((1,), (1,)), ((), ())),
            preferred_element_type=jnp.float32)    # (S, S) f32
        s_b = s_b + bias[b:b + 1, :]               # broadcast key-side mask
        m_b = jnp.max(s_b, axis=-1, keepdims=True)
        z_b = s_b - m_b
        if bf16_eup:
            # bf16 exp roughly doubles EUP throughput on v6e/v7x; f32 accum
            p_b = jnp.exp(z_b.astype(jnp.bfloat16))
            denom = jnp.sum(p_b.astype(jnp.float32), axis=-1, keepdims=True)
        else:
            p_f = jnp.exp(z_b)                     # f32 path (v5e and older)
            denom = jnp.sum(p_f, axis=-1, keepdims=True)
            p_b = p_f.astype(jnp.bfloat16)
        ctx_b = jnp.dot(p_b, vb, preferred_element_type=jnp.float32)
        # normalize after the matmul; approx reciprocal runs on the EUP slot
        # (documented: small relative error vs exact divide).
        ctx_b = ctx_b * pl.reciprocal(denom, approx=True)
        ctx_parts.append(ctx_b)
    ctx = ctx_parts[0] if BT == 1 else jnp.concatenate(ctx_parts, axis=0)

    attn_out = jnp.dot(ctx.astype(jnp.bfloat16), wo_ref[...],
                       preferred_element_type=jnp.float32)     # (BT*S, H) f32
    h1 = _layer_norm(x + attn_out, ln1g_ref[...], ln1b_ref[...])

    # --- feed forward ----------------------------------------------------------
    ffn = jnp.dot(h1.astype(jnp.bfloat16), w1_ref[...],
                  preferred_element_type=jnp.float32) + b1_ref[...]
    if bf16_eup:
        ffn = jax.nn.gelu(ffn.astype(jnp.bfloat16), approximate=True)
    else:
        ffn = jax.nn.gelu(ffn, approximate=True).astype(jnp.bfloat16)
    ffn = jnp.dot(ffn, w2_ref[...],
                  preferred_element_type=jnp.float32) + b2_ref[...]
    h2 = _layer_norm(h1 + ffn, ln2g_ref[...], ln2b_ref[...])    # (BT*S, H) f32

    seq_ref[...] = h2.reshape(BT, S, H)


# ----------------------------------------------------------------------------
# parameter construction (deterministic, in-script)
# ----------------------------------------------------------------------------
def init_params(key, vocab=64, type_vocab=2, max_pos=32, hidden=32, inter=64):
    ks = jax.random.split(key, 10)

    def w(k, shape):
        return (0.02 * jax.random.normal(k, shape)).astype(jnp.float32)

    return dict(
        word_emb=w(ks[0], (vocab, hidden)),
        pos_emb=w(ks[1], (max_pos, hidden)),
        seg_emb=w(ks[2], (type_vocab, hidden)),
        emb_ln_g=jnp.ones((hidden,), jnp.float32),
        emb_ln_b=jnp.zeros((hidden,), jnp.float32),
        wq=w(ks[3], (hidden, hidden)),
        wk=w(ks[4], (hidden, hidden)),
        wv=w(ks[5], (hidden, hidden)),
        wo=w(ks[6], (hidden, hidden)),
        ln1_g=jnp.ones((hidden,), jnp.float32),
        ln1_b=jnp.zeros((hidden,), jnp.float32),
        w1=w(ks[7], (hidden, inter)),
        b1=jnp.zeros((inter,), jnp.float32),
        w2=w(ks[8], (inter, hidden)),
        b2=jnp.zeros((hidden,), jnp.float32),
        ln2_g=jnp.ones((hidden,), jnp.float32),
        ln2_b=jnp.zeros((hidden,), jnp.float32),
        wp=w(ks[9], (hidden, hidden)),
        bp=jnp.zeros((hidden,), jnp.float32),
    )


def prepare_kernel_params(params):
    """One-time prep: fuse/stack QKV, fold 1/sqrt(H) into wq, pre-cast to bf16."""
    H = params['wq'].shape[0]
    bf16 = lambda a: a.astype(jnp.bfloat16)
    row = lambda a: a.reshape(1, -1).astype(jnp.float32)

    wq_scaled = params['wq'] * (1.0 / math.sqrt(H))   # fold attention scale
    fuse = (H % 128 == 0)
    if fuse:
        wqkv = bf16(jnp.concatenate(
            [wq_scaled, params['wk'], params['wv']], axis=1))   # (H, 3H)
    else:
        wqkv = bf16(jnp.stack(
            [wq_scaled, params['wk'], params['wv']], axis=0))   # (3, H, H)

    return dict(
        fuse_qkv=fuse,
        bf16_eup=_supports_bf16_transcendentals(),
        wqkv=wqkv,
        wo=bf16(params['wo']),
        ln1_g=row(params['ln1_g']), ln1_b=row(params['ln1_b']),
        w1=bf16(params['w1']), b1=row(params['b1']),
        w2=bf16(params['w2']), b2=row(params['b2']),
        ln2_g=row(params['ln2_g']), ln2_b=row(params['ln2_b']),
    )


# ----------------------------------------------------------------------------
# BaseNetwork.forward(texts, input_mask, segment_ids)
# ----------------------------------------------------------------------------
def base_network_forward(texts, input_mask, segment_ids, params, kparams):
    B, S = texts.shape
    H = params['word_emb'].shape[1]

    # --- glue: embedding lookups + embedding layer-norm (plain JAX) ----------
    emb = (jnp.take(params['word_emb'], texts, axis=0)
           + jnp.take(params['seg_emb'], segment_ids, axis=0)
           + params['pos_emb'][:S][None, :, :])
    x = _layer_norm(emb.astype(jnp.float32),
                    params['emb_ln_g'], params['emb_ln_b'])

    # additive attention bias from input_mask: 0 where attend, -1e9 where pad
    bias = (1.0 - input_mask.astype(jnp.float32)) * -1e9      # (B, S)

    # batch tile: pack several batch elements per grid step (amortize per-step
    # overhead / fill MXU rows).  TODO(synk): at real sizes make the parallel
    # axis batch x sequence-tile so both v7x TensorCores stay load-balanced.
    BT = B if B <= 8 else 8
    assert B % BT == 0, "batch must be divisible by the batch tile"

    kernel = functools.partial(
        encoder_kernel, batch_tile=BT, seq_len=S, hidden=H,
        fuse_qkv=kparams['fuse_qkv'], bf16_eup=kparams['bf16_eup'])

    weight_args = (kparams['wqkv'], kparams['wo'],
                   kparams['ln1_g'], kparams['ln1_b'],
                   kparams['w1'], kparams['b1'],
                   kparams['w2'], kparams['b2'],
                   kparams['ln2_g'], kparams['ln2_b'])

    # weights: full-array blocks with constant block index -> stay resident in
    # VMEM across the batch-tile grid (no re-DMA per grid step).
    def full(a):
        shp = a.shape
        return pl.BlockSpec(shp, lambda b, _n=len(shp): (0,) * _n)

    in_specs = ([pl.BlockSpec((BT, S, H), lambda b: (b, 0, 0)),   # x
                 pl.BlockSpec((BT, S), lambda b: (b, 0))]         # bias
                + [full(w) for w in weight_args])
    out_spec = pl.BlockSpec((BT, S, H), lambda b: (b, 0, 0))

    # derived VMEM limit: double-buffered activation blocks + weights + headroom,
    # capped at 64 MiB for v7x's smaller physical VMEM.
    act_bytes = 2 * (BT * S * H * 4) + (BT * S * 4)               # x + out + bias
    w_bytes = sum(int(w.nbytes) for w in weight_args)
    vmem_limit = int(min(max(4 * act_bytes + 2 * w_bytes + (8 << 20),
                             16 << 20), 64 << 20))

    seq_out = pl.pallas_call(
        kernel,
        out_shape=jax.ShapeDtypeStruct((B, S, H), jnp.float32),
        grid_spec=pltpu.PrefetchScalarGridSpec(
            num_scalar_prefetch=0,
            grid=(B // BT,),
            in_specs=in_specs,
            out_specs=out_spec,
        ),
        compiler_params=pltpu.CompilerParams(
            dimension_semantics=("parallel",),      # megacore split on v7x
            vmem_limit_bytes=vmem_limit,
        ),
    )(x, bias, *weight_args)

    # pooler out of the grid: one well-shaped (B,H) @ (H,H) matmul + tanh (XLA)
    pooled = jnp.tanh(seq_out[:, 0, :] @ params['wp'] + params['bp'])
    return seq_out, pooled


# ----------------------------------------------------------------------------
# main
# ----------------------------------------------------------------------------
if __name__ == "__main__":
    key = jax.random.PRNGKey(0)
    k_param, k_tok, k_seg = jax.random.split(key, 3)

    B, S, VOCAB, H, INTER = 2, 8, 64, 32, 64
    params = init_params(k_param, vocab=VOCAB, max_pos=32, hidden=H, inter=INTER)
    kparams = prepare_kernel_params(params)     # one-time bf16 cast / QKV prep

    texts = jax.random.randint(k_tok, (B, S), 0, VOCAB, dtype=jnp.int32)
    # mask: first 6 tokens real, last 2 padding
    input_mask = jnp.concatenate(
        [jnp.ones((B, 6), jnp.int32), jnp.zeros((B, 2), jnp.int32)], axis=1)
    segment_ids = jax.random.randint(k_seg, (B, S), 0, 2, dtype=jnp.int32)

    seq_out, pooled = base_network_forward(texts, input_mask, segment_ids,
                                           params, kparams)
    jax.block_until_ready((seq_out, pooled))

    assert seq_out.shape == (B, S, H) and pooled.shape == (B, H)
    assert bool(jnp.all(jnp.isfinite(seq_out))) and bool(jnp.all(jnp.isfinite(pooled)))
    print("KERNEL_OK")
</pallas_src>

<mosaic_0001>
module attributes {stable_mosaic.version = 11 : i64} {
  func.func @encoder_kernel(%arg0: i32, %arg1: memref<2x8x32xf32, #tpu.memory_space<vmem>>, %arg2: memref<2x8xf32, #tpu.memory_space<vmem>>, %arg3: memref<3x32x32xbf16, #tpu.memory_space<vmem>>, %arg4: memref<32x32xbf16, #tpu.memory_space<vmem>>, %arg5: memref<1x32xf32, #tpu.memory_space<vmem>>, %arg6: memref<1x32xf32, #tpu.memory_space<vmem>>, %arg7: memref<32x64xbf16, #tpu.memory_space<vmem>>, %arg8: memref<1x64xf32, #tpu.memory_space<vmem>>, %arg9: memref<64x32xbf16, #tpu.memory_space<vmem>>, %arg10: memref<1x32xf32, #tpu.memory_space<vmem>>, %arg11: memref<1x32xf32, #tpu.memory_space<vmem>>, %arg12: memref<1x32xf32, #tpu.memory_space<vmem>>, %arg13: memref<2x8x32xf32, #tpu.memory_space<vmem>>) attributes {dimension_semantics = [#tpu.dimension_semantics<parallel>], iteration_bounds = array<i64: 1>, scalar_prefetch = 0 : i64, scratch_operands = 0 : i64, tpu.core_type = #tpu.core_type<tc>, window_params = [{transform_indices = @transform_0, window_bounds = array<i64: 2, 8, 32>}, {transform_indices = @transform_1, window_bounds = array<i64: 2, 8>}, {pipeline_mode = #tpu.pipeline_mode<synchronous>, transform_indices = @transform_2, window_bounds = array<i64: 3, 32, 32>}, {pipeline_mode = #tpu.pipeline_mode<synchronous>, transform_indices = @transform_3, window_bounds = array<i64: 32, 32>}, {pipeline_mode = #tpu.pipeline_mode<synchronous>, transform_indices = @transform_4, window_bounds = array<i64: 1, 32>}, {pipeline_mode = #tpu.pipeline_mode<synchronous>, transform_indices = @transform_5, window_bounds = array<i64: 1, 32>}, {pipeline_mode = #tpu.pipeline_mode<synchronous>, transform_indices = @transform_6, window_bounds = array<i64: 32, 64>}, {pipeline_mode = #tpu.pipeline_mode<synchronous>, transform_indices = @transform_7, window_bounds = array<i64: 1, 64>}, {pipeline_mode = #tpu.pipeline_mode<synchronous>, transform_indices = @transform_8, window_bounds = array<i64: 64, 32>}, {pipeline_mode = #tpu.pipeline_mode<synchronous>, transform_indices = @transform_9, window_bounds = array<i64: 1, 32>}, {pipeline_mode = #tpu.pipeline_mode<synchronous>, transform_indices = @transform_10, window_bounds = array<i64: 1, 32>}, {pipeline_mode = #tpu.pipeline_mode<synchronous>, transform_indices = @transform_11, window_bounds = array<i64: 1, 32>}, {transform_indices = @transform_12, window_bounds = array<i64: 2, 8, 32>}]} {
    %c0 = arith.constant 0 : index
    %c0_0 = arith.constant 0 : index
    %c0_1 = arith.constant 0 : index
    %0 = vector.load %arg1[%c0, %c0_0, %c0_1] : memref<2x8x32xf32, #tpu.memory_space<vmem>>, vector<2x8x32xf32>
    %1 = vector.shape_cast %0 : vector<2x8x32xf32> to vector<16x32xf32>
    %2 = arith.truncf %1 : vector<16x32xf32> to vector<16x32xbf16>
    %c0_2 = arith.constant 0 : index
    %c0_3 = arith.constant 0 : index
    %c0_4 = arith.constant 0 : index
    %3 = vector.load %arg3[%c0_2, %c0_3, %c0_4] : memref<3x32x32xbf16, #tpu.memory_space<vmem>>, vector<1x32x32xbf16>
    %4 = vector.shape_cast %3 : vector<1x32x32xbf16> to vector<32x32xbf16>
    %cst = arith.constant dense<0.000000e+00> : vector<16x32xf32>
    %5 = tpu.matmul %2, %4, %cst {dimension_numbers = #tpu.dot_dimension_numbers<[1], [0], [0], [1], [0, 0, 1, 1], [], []>} : vector<16x32xbf16>, vector<32x32xbf16>, vector<16x32xf32> -> vector<16x32xf32>
    %6 = arith.truncf %5 : vector<16x32xf32> to vector<16x32xbf16>
    %c1 = arith.constant 1 : index
    %c0_5 = arith.constant 0 : index
    %c0_6 = arith.constant 0 : index
    %7 = vector.load %arg3[%c1, %c0_5, %c0_6] : memref<3x32x32xbf16, #tpu.memory_space<vmem>>, vector<1x32x32xbf16>
    %8 = vector.shape_cast %7 : vector<1x32x32xbf16> to vector<32x32xbf16>
    %cst_7 = arith.constant dense<0.000000e+00> : vector<16x32xf32>
    %9 = tpu.matmul %2, %8, %cst_7 {dimension_numbers = #tpu.dot_dimension_numbers<[1], [0], [0], [1], [0, 0, 1, 1], [], []>} : vector<16x32xbf16>, vector<32x32xbf16>, vector<16x32xf32> -> vector<16x32xf32>
    %10 = arith.truncf %9 : vector<16x32xf32> to vector<16x32xbf16>
    %c2 = arith.constant 2 : index
    %c0_8 = arith.constant 0 : index
    %c0_9 = arith.constant 0 : index
    %11 = vector.load %arg3[%c2, %c0_8, %c0_9] : memref<3x32x32xbf16, #tpu.memory_space<vmem>>, vector<1x32x32xbf16>
    %12 = vector.shape_cast %11 : vector<1x32x32xbf16> to vector<32x32xbf16>
    %cst_10 = arith.constant dense<0.000000e+00> : vector<16x32xf32>
    %13 = tpu.matmul %2, %12, %cst_10 {dimension_numbers = #tpu.dot_dimension_numbers<[1], [0], [0], [1], [0, 0, 1, 1], [], []>} : vector<16x32xbf16>, vector<32x32xbf16>, vector<16x32xf32> -> vector<16x32xf32>
    %14 = arith.truncf %13 : vector<16x32xf32> to vector<16x32xbf16>
    %c0_11 = arith.constant 0 : index
    %c0_12 = arith.constant 0 : index
    %15 = vector.load %arg2[%c0_11, %c0_12] : memref<2x8xf32, #tpu.memory_space<vmem>>, vector<2x8xf32>
    %16 = vector.extract_strided_slice %6 {offsets = [0, 0], sizes = [8, 32], strides = [1, 1]} : vector<16x32xbf16> to vector<8x32xbf16>
    %17 = vector.extract_strided_slice %10 {offsets = [0, 0], sizes = [8, 32], strides = [1, 1]} : vector<16x32xbf16> to vector<8x32xbf16>
    %18 = vector.extract_strided_slice %14 {offsets = [0, 0], sizes = [8, 32], strides = [1, 1]} : vector<16x32xbf16> to vector<8x32xbf16>
    %cst_13 = arith.constant dense<0.000000e+00> : vector<8x8xf32>
    %19 = tpu.matmul %16, %17, %cst_13 {dimension_numbers = #tpu.dot_dimension_numbers<[1], [1], [0], [0], [0, 0, 1, 0], [], []>} : vector<8x32xbf16>, vector<8x32xbf16>, vector<8x8xf32> -> vector<8x8xf32>
    %20 = vector.extract_strided_slice %15 {offsets = [0, 0], sizes = [1, 8], strides = [1, 1]} : vector<2x8xf32> to vector<1x8xf32>
    %21 = vector.broadcast %20 : vector<1x8xf32> to vector<8x8xf32>
    %22 = arith.addf %19, %21 : vector<8x8xf32>
    %cst_14 = arith.constant dense<0xFF800000> : vector<8xf32>
    %23 = vector.multi_reduction <maximumf>, %22, %cst_14 [1] : vector<8x8xf32> to vector<8xf32>
    %24 = vector.shape_cast %23 : vector<8xf32> to vector<8x1xf32>
    %25 = vector.broadcast %24 : vector<8x1xf32> to vector<8x8xf32>
    %26 = arith.subf %22, %25 : vector<8x8xf32>
    %27 = arith.truncf %26 : vector<8x8xf32> to vector<8x8xbf16>
    %28 = math.exp %27 : vector<8x8xbf16>
    %29 = arith.extf %28 : vector<8x8xbf16> to vector<8x8xf32>
    %cst_15 = arith.constant dense<0.000000e+00> : vector<8xf32>
    %30 = vector.multi_reduction <add>, %29, %cst_15 [1] : vector<8x8xf32> to vector<8xf32>
    %31 = vector.shape_cast %30 : vector<8xf32> to vector<8x1xf32>
    %cst_16 = arith.constant dense<0.000000e+00> : vector<8x32xf32>
    %32 = tpu.matmul %28, %18, %cst_16 {dimension_numbers = #tpu.dot_dimension_numbers<[1], [0], [0], [1], [0, 0, 1, 1], [], []>} : vector<8x8xbf16>, vector<8x32xbf16>, vector<8x32xf32> -> vector<8x32xf32>
    %33 = tpu.reciprocal %31 {approx = true} : vector<8x1xf32> -> vector<8x1xf32>
    %34 = vector.broadcast %33 : vector<8x1xf32> to vector<8x32xf32>
    %35 = arith.mulf %32, %34 : vector<8x32xf32>
    %36 = vector.extract_strided_slice %6 {offsets = [8, 0], sizes = [8, 32], strides = [1, 1]} : vector<16x32xbf16> to vector<8x32xbf16>
    %37 = vector.extract_strided_slice %10 {offsets = [8, 0], sizes = [8, 32], strides = [1, 1]} : vector<16x32xbf16> to vector<8x32xbf16>
    %38 = vector.extract_strided_slice %14 {offsets = [8, 0], sizes = [8, 32], strides = [1, 1]} : vector<16x32xbf16> to vector<8x32xbf16>
    %cst_17 = arith.constant dense<0.000000e+00> : vector<8x8xf32>
    %39 = tpu.matmul %36, %37, %cst_17 {dimension_numbers = #tpu.dot_dimension_numbers<[1], [1], [0], [0], [0, 0, 1, 0], [], []>} : vector<8x32xbf16>, vector<8x32xbf16>, vector<8x8xf32> -> vector<8x8xf32>
    %40 = vector.extract_strided_slice %15 {offsets = [1, 0], sizes = [1, 8], strides = [1, 1]} : vector<2x8xf32> to vector<1x8xf32>
    %41 = vector.broadcast %40 : vector<1x8xf32> to vector<8x8xf32>
    %42 = arith.addf %39, %41 : vector<8x8xf32>
    %cst_18 = arith.constant dense<0xFF800000> : vector<8xf32>
    %43 = vector.multi_reduction <maximumf>, %42, %cst_18 [1] : vector<8x8xf32> to vector<8xf32>
    %44 = vector.shape_cast %43 : vector<8xf32> to vector<8x1xf32>
    %45 = vector.broadcast %44 : vector<8x1xf32> to vector<8x8xf32>
    %46 = arith.subf %42, %45 : vector<8x8xf32>
    %47 = arith.truncf %46 : vector<8x8xf32> to vector<8x8xbf16>
    %48 = math.exp %47 : vector<8x8xbf16>
    %49 = arith.extf %48 : vector<8x8xbf16> to vector<8x8xf32>
    %cst_19 = arith.constant dense<0.000000e+00> : vector<8xf32>
    %50 = vector.multi_reduction <add>, %49, %cst_19 [1] : vector<8x8xf32> to vector<8xf32>
    %51 = vector.shape_cast %50 : vector<8xf32> to vector<8x1xf32>
    %cst_20 = arith.constant dense<0.000000e+00> : vector<8x32xf32>
    %52 = tpu.matmul %48, %38, %cst_20 {dimension_numbers = #tpu.dot_dimension_numbers<[1], [0], [0], [1], [0, 0, 1, 1], [], []>} : vector<8x8xbf16>, vector<8x32xbf16>, vector<8x32xf32> -> vector<8x32xf32>
    %53 = tpu.reciprocal %51 {approx = true} : vector<8x1xf32> -> vector<8x1xf32>
    %54 = vector.broadcast %53 : vector<8x1xf32> to vector<8x32xf32>
    %55 = arith.mulf %52, %54 : vector<8x32xf32>
    %56 = tpu.concatenate %35, %55 in 0 : vector<8x32xf32>, vector<8x32xf32> -> vector<16x32xf32>
    %57 = arith.truncf %56 : vector<16x32xf32> to vector<16x32xbf16>
    %c0_21 = arith.constant 0 : index
    %c0_22 = arith.constant 0 : index
    %58 = vector.load %arg4[%c0_21, %c0_22] : memref<32x32xbf16, #tpu.memory_space<vmem>>, vector<32x32xbf16>
    %cst_23 = arith.constant dense<0.000000e+00> : vector<16x32xf32>
    %59 = tpu.matmul %57, %58, %cst_23 {dimension_numbers = #tpu.dot_dimension_numbers<[1], [0], [0], [1], [0, 0, 1, 1], [], []>} : vector<16x32xbf16>, vector<32x32xbf16>, vector<16x32xf32> -> vector<16x32xf32>
    %60 = arith.addf %1, %59 : vector<16x32xf32>
    %c0_24 = arith.constant 0 : index
    %c0_25 = arith.constant 0 : index
    %61 = vector.load %arg5[%c0_24, %c0_25] : memref<1x32xf32, #tpu.memory_space<vmem>>, vector<1x32xf32>
    %c0_26 = arith.constant 0 : index
    %c0_27 = arith.constant 0 : index
    %62 = vector.load %arg6[%c0_26, %c0_27] : memref<1x32xf32, #tpu.memory_space<vmem>>, vector<1x32xf32>
    %cst_28 = arith.constant dense<0.000000e+00> : vector<16xf32>
    %63 = vector.multi_reduction <add>, %60, %cst_28 [1] : vector<16x32xf32> to vector<16xf32>
    %64 = vector.shape_cast %63 : vector<16xf32> to vector<16x1xf32>
    %cst_29 = arith.constant 3.200000e+01 : f32
    %65 = vector.broadcast %cst_29 : f32 to vector<16x1xf32>
    %66 = arith.divf %64, %65 : vector<16x1xf32>
    %67 = vector.broadcast %66 : vector<16x1xf32> to vector<16x32xf32>
    %68 = arith.subf %60, %67 : vector<16x32xf32>
    %69 = arith.mulf %68, %68 : vector<16x32xf32>
    %cst_30 = arith.constant dense<0.000000e+00> : vector<16xf32>
    %70 = vector.multi_reduction <add>, %69, %cst_30 [1] : vector<16x32xf32> to vector<16xf32>
    %71 = vector.shape_cast %70 : vector<16xf32> to vector<16x1xf32>
    %cst_31 = arith.constant 3.200000e+01 : f32
    %72 = vector.broadcast %cst_31 : f32 to vector<16x1xf32>
    %73 = arith.divf %71, %72 : vector<16x1xf32>
    %74 = vector.broadcast %66 : vector<16x1xf32> to vector<16x32xf32>
    %75 = arith.subf %60, %74 : vector<16x32xf32>
    %cst_32 = arith.constant 9.99999996E-13 : f32
    %76 = vector.broadcast %cst_32 : f32 to vector<16x1xf32>
    %77 = arith.addf %73, %76 : vector<16x1xf32>
    %78 = math.rsqrt %77 : vector<16x1xf32>
    %79 = vector.broadcast %78 : vector<16x1xf32> to vector<16x32xf32>
    %80 = arith.mulf %75, %79 : vector<16x32xf32>
    %81 = vector.broadcast %61 : vector<1x32xf32> to vector<16x32xf32>
    %82 = arith.mulf %80, %81 : vector<16x32xf32>
    %83 = vector.broadcast %62 : vector<1x32xf32> to vector<16x32xf32>
    %84 = arith.addf %82, %83 : vector<16x32xf32>
    %85 = arith.truncf %84 : vector<16x32xf32> to vector<16x32xbf16>
    %c0_33 = arith.constant 0 : index
    %c0_34 = arith.constant 0 : index
    %86 = vector.load %arg7[%c0_33, %c0_34] : memref<32x64xbf16, #tpu.memory_space<vmem>>, vector<32x64xbf16>
    %cst_35 = arith.constant dense<0.000000e+00> : vector<16x64xf32>
    %87 = tpu.matmul %85, %86, %cst_35 {dimension_numbers = #tpu.dot_dimension_numbers<[1], [0], [0], [1], [0, 0, 1, 1], [], []>} : vector<16x32xbf16>, vector<32x64xbf16>, vector<16x64xf32> -> vector<16x64xf32>
    %c0_36 = arith.constant 0 : index
    %c0_37 = arith.constant 0 : index
    %88 = vector.load %arg8[%c0_36, %c0_37] : memref<1x64xf32, #tpu.memory_space<vmem>>, vector<1x64xf32>
    %89 = vector.broadcast %88 : vector<1x64xf32> to vector<16x64xf32>
    %90 = arith.addf %87, %89 : vector<16x64xf32>
    %91 = arith.truncf %90 : vector<16x64xf32> to vector<16x64xbf16>
    %92 = arith.mulf %91, %91 : vector<16x64xbf16>
    %93 = arith.mulf %91, %92 : vector<16x64xbf16>
    %cst_38 = arith.constant 4.467770e-02 : bf16
    %94 = vector.broadcast %cst_38 : bf16 to vector<16x64xbf16>
    %95 = arith.mulf %94, %93 : vector<16x64xbf16>
    %96 = arith.addf %91, %95 : vector<16x64xbf16>
    %cst_39 = arith.constant 7.968750e-01 : bf16
    %97 = vector.broadcast %cst_39 : bf16 to vector<16x64xbf16>
    %98 = arith.mulf %97, %96 : vector<16x64xbf16>
    %99 = math.tanh %98 : vector<16x64xbf16>
    %cst_40 = arith.constant 1.000000e+00 : bf16
    %100 = vector.broadcast %cst_40 : bf16 to vector<16x64xbf16>
    %101 = arith.addf %100, %99 : vector<16x64xbf16>
    %cst_41 = arith.constant 5.000000e-01 : bf16
    %102 = vector.broadcast %cst_41 : bf16 to vector<16x64xbf16>
    %103 = arith.mulf %102, %101 : vector<16x64xbf16>
    %104 = arith.mulf %91, %103 : vector<16x64xbf16>
    %c0_42 = arith.constant 0 : index
    %c0_43 = arith.constant 0 : index
    %105 = vector.load %arg9[%c0_42, %c0_43] : memref<64x32xbf16, #tpu.memory_space<vmem>>, vector<64x32xbf16>
    %cst_44 = arith.constant dense<0.000000e+00> : vector<16x32xf32>
    %106 = tpu.matmul %104, %105, %cst_44 {dimension_numbers = #tpu.dot_dimension_numbers<[1], [0], [0], [1], [0, 0, 1, 1], [], []>} : vector<16x64xbf16>, vector<64x32xbf16>, vector<16x32xf32> -> vector<16x32xf32>
    %c0_45 = arith.constant 0 : index
    %c0_46 = arith.constant 0 : index
    %107 = vector.load %arg10[%c0_45, %c0_46] : memref<1x32xf32, #tpu.memory_space<vmem>>, vector<1x32xf32>
    %108 = vector.broadcast %107 : vector<1x32xf32> to vector<16x32xf32>
    %109 = arith.addf %106, %108 : vector<16x32xf32>
    %110 = arith.addf %84, %109 : vector<16x32xf32>
    %c0_47 = arith.constant 0 : index
    %c0_48 = arith.constant 0 : index
    %111 = vector.load %arg11[%c0_47, %c0_48] : memref<1x32xf32, #tpu.memory_space<vmem>>, vector<1x32xf32>
    %c0_49 = arith.constant 0 : index
    %c0_50 = arith.constant 0 : index
    %112 = vector.load %arg12[%c0_49, %c0_50] : memref<1x32xf32, #tpu.memory_space<vmem>>, vector<1x32xf32>
    %cst_51 = arith.constant dense<0.000000e+00> : vector<16xf32>
    %113 = vector.multi_reduction <add>, %110, %cst_51 [1] : vector<16x32xf32> to vector<16xf32>
    %114 = vector.shape_cast %113 : vector<16xf32> to vector<16x1xf32>
    %cst_52 = arith.constant 3.200000e+01 : f32
    %115 = vector.broadcast %cst_52 : f32 to vector<16x1xf32>
    %116 = arith.divf %114, %115 : vector<16x1xf32>
    %117 = vector.broadcast %116 : vector<16x1xf32> to vector<16x32xf32>
    %118 = arith.subf %110, %117 : vector<16x32xf32>
    %119 = arith.mulf %118, %118 : vector<16x32xf32>
    %cst_53 = arith.constant dense<0.000000e+00> : vector<16xf32>
    %120 = vector.multi_reduction <add>, %119, %cst_53 [1] : vector<16x32xf32> to vector<16xf32>
    %121 = vector.shape_cast %120 : vector<16xf32> to vector<16x1xf32>
    %cst_54 = arith.constant 3.200000e+01 : f32
    %122 = vector.broadcast %cst_54 : f32 to vector<16x1xf32>
    %123 = arith.divf %121, %122 : vector<16x1xf32>
    %124 = vector.broadcast %116 : vector<16x1xf32> to vector<16x32xf32>
    %125 = arith.subf %110, %124 : vector<16x32xf32>
    %cst_55 = arith.constant 9.99999996E-13 : f32
    %126 = vector.broadcast %cst_55 : f32 to vector<16x1xf32>
    %127 = arith.addf %123, %126 : vector<16x1xf32>
    %128 = math.rsqrt %127 : vector<16x1xf32>
    %129 = vector.broadcast %128 : vector<16x1xf32> to vector<16x32xf32>
    %130 = arith.mulf %125, %129 : vector<16x32xf32>
    %131 = vector.broadcast %111 : vector<1x32xf32> to vector<16x32xf32>
    %132 = arith.mulf %130, %131 : vector<16x32xf32>
    %133 = vector.broadcast %112 : vector<1x32xf32> to vector<16x32xf32>
    %134 = arith.addf %132, %133 : vector<16x32xf32>
    %135 = vector.shape_cast %134 : vector<16x32xf32> to vector<2x8x32xf32>
    %c0_56 = arith.constant 0 : index
    %c0_57 = arith.constant 0 : index
    %c0_58 = arith.constant 0 : index
    %136 = vector.load %arg13[%c0_56, %c0_57, %c0_58] : memref<2x8x32xf32, #tpu.memory_space<vmem>>, vector<2x8x32xf32>
    tpu.vector_store %arg13[%c0_56, %c0_57, %c0_58], %135 {strides = array<i32>} : memref<2x8x32xf32, #tpu.memory_space<vmem>>, vector<2x8x32xf32>,
    return
  }
  func.func @transform_0(%arg0: i32) -> (i32, i32, i32) {
    %c0_i32 = arith.constant 0 : i32
    %c0_i32_0 = arith.constant 0 : i32
    %c0_i32_1 = arith.constant 0 : i32
    return %arg0, %c0_i32, %c0_i32_0 : i32, i32, i32
  }
  func.func @transform_1(%arg0: i32) -> (i32, i32) {
    %c0_i32 = arith.constant 0 : i32
    %c0_i32_0 = arith.constant 0 : i32
    return %arg0, %c0_i32 : i32, i32
  }
  func.func @transform_2(%arg0: i32) -> (i32, i32, i32) {
    %c0_i32 = arith.constant 0 : i32
    %c0_i32_0 = arith.constant 0 : i32
    %c0_i32_1 = arith.constant 0 : i32
    %c0_i32_2 = arith.constant 0 : i32
    return %c0_i32, %c0_i32_0, %c0_i32_1 : i32, i32, i32
  }
  func.func @transform_3(%arg0: i32) -> (i32, i32) {
    %c0_i32 = arith.constant 0 : i32
    %c0_i32_0 = arith.constant 0 : i32
    %c0_i32_1 = arith.constant 0 : i32
    return %c0_i32, %c0_i32_0 : i32, i32
  }
  func.func @transform_4(%arg0: i32) -> (i32, i32) {
    %c0_i32 = arith.constant 0 : i32
    %c0_i32_0 = arith.constant 0 : i32
    %c0_i32_1 = arith.constant 0 : i32
    return %c0_i32, %c0_i32_0 : i32, i32
  }
  func.func @transform_5(%arg0: i32) -> (i32, i32) {
    %c0_i32 = arith.constant 0 : i32
    %c0_i32_0 = arith.constant 0 : i32
    %c0_i32_1 = arith.constant 0 : i32
    return %c0_i32, %c0_i32_0 : i32, i32
  }
  func.func @transform_6(%arg0: i32) -> (i32, i32) {
    %c0_i32 = arith.constant 0 : i32
    %c0_i32_0 = arith.constant 0 : i32
    %c0_i32_1 = arith.constant 0 : i32
    return %c0_i32, %c0_i32_0 : i32, i32
  }
  func.func @transform_7(%arg0: i32) -> (i32, i32) {
    %c0_i32 = arith.constant 0 : i32
    %c0_i32_0 = arith.constant 0 : i32
    %c0_i32_1 = arith.constant 0 : i32
    return %c0_i32, %c0_i32_0 : i32, i32
  }
  func.func @transform_8(%arg0: i32) -> (i32, i32) {
    %c0_i32 = arith.constant 0 : i32
    %c0_i32_0 = arith.constant 0 : i32
    %c0_i32_1 = arith.constant 0 : i32
    return %c0_i32, %c0_i32_0 : i32, i32
  }
  func.func @transform_9(%arg0: i32) -> (i32, i32) {
    %c0_i32 = arith.constant 0 : i32
    %c0_i32_0 = arith.constant 0 : i32
    %c0_i32_1 = arith.constant 0 : i32
    return %c0_i32, %c0_i32_0 : i32, i32
  }
  func.func @transform_10(%arg0: i32) -> (i32, i32) {
    %c0_i32 = arith.constant 0 : i32
    %c0_i32_0 = arith.constant 0 : i32
    %c0_i32_1 = arith.constant 0 : i32
    return %c0_i32, %c0_i32_0 : i32, i32
  }
  func.func @transform_11(%arg0: i32) -> (i32, i32) {
    %c0_i32 = arith.constant 0 : i32
    %c0_i32_0 = arith.constant 0 : i32
    %c0_i32_1 = arith.constant 0 : i32
    return %c0_i32, %c0_i32_0 : i32, i32
  }
  func.func @transform_12(%arg0: i32) -> (i32, i32, i32) {
    %c0_i32 = arith.constant 0 : i32
    %c0_i32_0 = arith.constant 0 : i32
    %c0_i32_1 = arith.constant 0 : i32
    return %arg0, %c0_i32, %c0_i32_0 : i32, i32, i32
  }
}

</mosaic_0001>

<llo_original>
// kernel: tpu_custom_call.1
$region0: #{tpu_custom_call.1}
  #allocation0 [shape = 'u32[]', space=smem, size = 0x4, offset = 0x4, fixed_abs, tag = 'smem constant byte address 0x4 - core index']
  #allocation1 [shape = 'u32[144,128]{1,0:T(1,128)}', space=vmem, size = 0x12000, scoped, tag = 'internal scratch']
  %s0 = inlined_call_operand.hbm [shape: f32[2,8,32], index: 0, kind: input, shape index: {}]
  %s1 = inlined_call_operand.vmem [shape: f32[2,8], index: 1, kind: input, shape index: {}]
  %s2 = inlined_call_operand.vmem [shape: bf16[3,32,32], index: 2, kind: input, shape index: {}]
  %s3 = inlined_call_operand.hbm [shape: bf16[32,32], index: 3, kind: input, shape index: {}]
  %s4 = inlined_call_operand.vmem [shape: f32[1,32], index: 4, kind: input, shape index: {}]
  %s5 = inlined_call_operand.vmem [shape: f32[1,32], index: 5, kind: input, shape index: {}]
  %s6 = inlined_call_operand.hbm [shape: bf16[32,64], index: 6, kind: input, shape index: {}]
  %s7 = inlined_call_operand.vmem [shape: f32[1,64], index: 7, kind: input, shape index: {}]
  %s8 = inlined_call_operand.vmem [shape: bf16[64,32], index: 8, kind: input, shape index: {}]
  %s9 = inlined_call_operand.vmem [shape: f32[1,32], index: 9, kind: input, shape index: {}]
  %s10 = inlined_call_operand.vmem [shape: f32[1,32], index: 10, kind: input, shape index: {}]
  %s11 = inlined_call_operand.vmem [shape: f32[1,32], index: 11, kind: input, shape index: {}]
  %s12 = inlined_call_operand.hbm [shape: f32[2,8,32], index: 12, kind: output, shape index: {}]
  %s13 = sld [smem:[#allocation0]]
  $region70: #{tpu_custom_call.1} parent=0
    _
  %s15 = ssub.s32 1, %s13
  %s16 = scalar_select 0, %s15, %s13
  $region1: #{tpu_custom_call.1} parent=0
    #allocation2 [shape = 'u8[8192]{0}', space=vmem, size = 0x2000, scoped, tag = 'input window, operand 0, single buffered']
    #allocation3 [shape = 's32[1]{0}', space=sflag, size = 0x4, scoped, tag = 'scoped memory for tpu_custom_call.1']
    #allocation4 [shape = 's32[1]{0}', space=sflag, size = 0x4, scoped, tag = 'scoped memory for tpu_custom_call.1']
    #allocation5 [shape = 'u8[8192]{0}', space=vmem, size = 0x2000, scoped, tag = 'input window, operand 3, single buffered']
    #allocation6 [shape = 's32[1]{0}', space=sflag, size = 0x4, scoped, tag = 'scoped memory for tpu_custom_call.1']
    #allocation7 [shape = 'u8[8192]{0}', space=vmem, size = 0x2000, scoped, tag = 'input window, operand 6, single buffered']
    #allocation8 [shape = 'u8[8192]{0}', space=vmem, size = 0x2000, scoped, tag = 'output window, operand 0, single buffered']
    %17 = vsyncpa [#allocation3], 0
    %18 = vsyncpa [#allocation6], 0
    %19 = vsyncpa [#allocation4], 0
    // Predicated region
    $region2: #{tpu_custom_call.1} parent=1 // pred_check
      _
    $region3: #{tpu_custom_call.1} parent=1 // pred_check_branch
      %21 = sbr.rel (0) target = $region5
    $region4: #{tpu_custom_call.1} parent=1 // pred_region
      %s23 = ssub.s32 256, 256
      %24 = vsyncadd [#allocation3], %s23
      %s25 = sshll.u32 [#allocation2], 4
      %s26 = int_to_ptr.vmem [resolvable:$true] %s25
      %31 = dma.hbm_to_vmem [thread:$0]  %s0, 256, %s26, [#allocation3], 128, 128, 8
    $region5: #{tpu_custom_call.1} parent=1 // pred_fallthru
      _
    // Predicated region
    $region6: #{tpu_custom_call.1} parent=1 // pred_check
      _
    $region7: #{tpu_custom_call.1} parent=1 // pred_check_branch
      %33 = sbr.rel (0) target = $region9
    $region8: #{tpu_custom_call.1} parent=1 // pred_region
      _
    $region9: #{tpu_custom_call.1} parent=1 // pred_fallthru
      _
    // Predicated region
    $region10: #{tpu_custom_call.1} parent=1 // pred_check
      _
    $region11: #{tpu_custom_call.1} parent=1 // pred_check_branch
      %35 = sbr.rel (0) target = $region13
    $region12: #{tpu_custom_call.1} parent=1 // pred_region
      _
    $region13: #{tpu_custom_call.1} parent=1 // pred_fallthru
      _
    // Predicated region
    $region14: #{tpu_custom_call.1} parent=1 // pred_check
      _
    $region15: #{tpu_custom_call.1} parent=1 // pred_check_branch
      %37 = sbr.rel (0) target = $region17
    $region16: #{tpu_custom_call.1} parent=1 // pred_region
      %s39 = ssub.s32 256, 256
      %40 = vsyncadd [#allocation6], %s39
      %s41 = sshll.u32 [#allocation5], 4
      %s42 = int_to_ptr.vmem [resolvable:$true] %s41
      %47 = dma.hbm_to_vmem [thread:$0]  %s3, 256, %s42, [#allocation6], 64, 64, 4
    $region17: #{tpu_custom_call.1} parent=1 // pred_fallthru
      _
    // Predicated region
    $region18: #{tpu_custom_call.1} parent=1 // pred_check
      _
    $region19: #{tpu_custom_call.1} parent=1 // pred_check_branch
      %49 = sbr.rel (0) target = $region21
    $region20: #{tpu_custom_call.1} parent=1 // pred_region
      _
    $region21: #{tpu_custom_call.1} parent=1 // pred_fallthru
      _
    // Predicated region
    $region22: #{tpu_custom_call.1} parent=1 // pred_check
      _
    $region23: #{tpu_custom_call.1} parent=1 // pred_check_branch
      %51 = sbr.rel (0) target = $region25
    $region24: #{tpu_custom_call.1} parent=1 // pred_region
      _
    $region25: #{tpu_custom_call.1} parent=1 // pred_fallthru
      _
    // Predicated region
    $region26: #{tpu_custom_call.1} parent=1 // pred_check
      _
    $region27: #{tpu_custom_call.1} parent=1 // pred_check_branch
      %53 = sbr.rel (0) target = $region29
    $region28: #{tpu_custom_call.1} parent=1 // pred_region
      %s55 = ssub.s32 256, 256
      %56 = vsyncadd [#allocation6], %s55
      %s57 = sshll.u32 [#allocation7], 4
      %s58 = int_to_ptr.vmem [resolvable:$true] %s57
      %63 = dma.hbm_to_vmem [thread:$0]  %s6, 256, %s58, [#allocation6], 64, 64, 4
    $region29: #{tpu_custom_call.1} parent=1 // pred_fallthru
      _
    // Predicated region
    $region30: #{tpu_custom_call.1} parent=1 // pred_check
      _
    $region31: #{tpu_custom_call.1} parent=1 // pred_check_branch
      %65 = sbr.rel (0) target = $region33
    $region32: #{tpu_custom_call.1} parent=1 // pred_region
      _
    $region33: #{tpu_custom_call.1} parent=1 // pred_fallthru
      _
    // Predicated region
    $region34: #{tpu_custom_call.1} parent=1 // pred_check
      _
    $region35: #{tpu_custom_call.1} parent=1 // pred_check_branch
      %67 = sbr.rel (0) target = $region37
    $region36: #{tpu_custom_call.1} parent=1 // pred_region
      _
    $region37: #{tpu_custom_call.1} parent=1 // pred_fallthru
      _
    // Predicated region
    $region38: #{tpu_custom_call.1} parent=1 // pred_check
      _
    $region39: #{tpu_custom_call.1} parent=1 // pred_check_branch
      %69 = sbr.rel (0) target = $region41
    $region40: #{tpu_custom_call.1} parent=1 // pred_region
      _
    $region41: #{tpu_custom_call.1} parent=1 // pred_fallthru
      _
    // Predicated region
    $region42: #{tpu_custom_call.1} parent=1 // pred_check
      _
    $region43: #{tpu_custom_call.1} parent=1 // pred_check_branch
      %71 = sbr.rel (0) target = $region45
    $region44: #{tpu_custom_call.1} parent=1 // pred_region
      _
    $region45: #{tpu_custom_call.1} parent=1 // pred_fallthru
      _
    // Predicated region
    $region46: #{tpu_custom_call.1} parent=1 // pred_check
      _
    $region47: #{tpu_custom_call.1} parent=1 // pred_check_branch
      %73 = sbr.rel (0) target = $region49
    $region48: #{tpu_custom_call.1} parent=1 // pred_region
      _
    $region49: #{tpu_custom_call.1} parent=1 // pred_fallthru
      _
    // Predicated region
    $region50: #{tpu_custom_call.1} parent=1 // pred_check
      _
    $region51: #{tpu_custom_call.1} parent=1 // pred_check_branch
      %75 = sbr.rel (0) target = $region53
    $region52: #{tpu_custom_call.1} parent=1 // pred_region
      %76 = dma.done [#allocation3], 256
    $region53: #{tpu_custom_call.1} parent=1 // pred_fallthru
      _
    // Predicated region
    $region54: #{tpu_custom_call.1} parent=1 // pred_check
      _
    $region55: #{tpu_custom_call.1} parent=1 // pred_check_branch
      %78 = sbr.rel (0) target = $region57
    $region56: #{tpu_custom_call.1} parent=1 // pred_region
      %79 = dma.done [#allocation6], 256
    $region57: #{tpu_custom_call.1} parent=1 // pred_fallthru
      _
    // Predicated region
    $region58: #{tpu_custom_call.1} parent=1 // pred_check
      _
    $region59: #{tpu_custom_call.1} parent=1 // pred_check_branch
      %81 = sbr.rel (0) target = $region61
    $region60: #{tpu_custom_call.1} parent=1 // pred_region
      %82 = dma.done [#allocation6], 256
    $region61: #{tpu_custom_call.1} parent=1 // pred_fallthru
      _
    %v88 = vld [vmem:[#allocation2] sm:$0xff]
    %v89 = vld [vmem:[#allocation2 + $0x8] sm:$0xff]
    %v90 = vpack.c.bf16 %v89, %v88
    %v91 = vld [vmem:[%s2] sm:$0xf]
    %v92 = vld [vmem:[%s2 + $0x4] sm:$0xf]
    %v93 = vld [vmem:[%s2 + $0x8] sm:$0xf]
    %v94 = vld [vmem:[%s2 + $0xc] sm:$0xf]
    %v99 = vunpack.c.l.b16 %v91
    %v100 = vunpack.c.l.b16 %v92
    %v101 = vunpack.c.l.b16 %v93
    %v102 = vunpack.c.l.b16 %v94
    %v103 = vpack.c.b16 %v100, %v99
    %v104 = vpack.c.b16 %v102, %v101
    %vm107 = vcmask 261120
    %v109 = vsel %vm107, %v90, 0
    %111 = vmatprep.subr.bf16.mxu0 0
    %112 = vmatpush1.bf16.msra.mxu0 0
    %113 = vmatprep.subr.bf16.mxu0 0
    %114 = vmatpush1.bf16.msra.mxu0 0
    %115 = vmatprep.subr.bf16.mxu0 0
    %116 = vmatpush1.bf16.msra.mxu0 0
    %117 = vmatprep.subr.bf16.mxu0 0
    %118 = vmatpush1.bf16.msra.mxu0 0
    %119 = vmatprep.subr.bf16.mxu0 0
    %120 = vmatpush1.bf16.msra.mxu0 0
    %121 = vmatprep.subr.bf16.mxu0 0
    %122 = vmatpush1.bf16.msra.mxu0 0
    %123 = vmatprep.subr.bf16.mxu0 0
    %124 = vmatpush1.bf16.msra.mxu0 %v104
    %125 = vmatprep.subr.bf16.mxu0 0
    %126 = vmatpush1.bf16.msra.mxu0 %v103
    %127 = vmatprep.subr.bf16.mxu0 0
    %128 = vmatpush2.bf16.msra.mxu0 0
    %129 = vmatprep.subr.bf16.mxu0 0
    %130 = vmatpush2.bf16.msra.mxu0 0
    %131 = vmatprep.subr.bf16.mxu0 0
    %132 = vmatpush2.bf16.msra.mxu0 0
    %133 = vmatprep.subr.bf16.mxu0 0
    %134 = vmatpush2.bf16.msra.mxu0 0
    %135 = vmatprep.subr.bf16.mxu0 0
    %136 = vmatpush2.bf16.msra.mxu0 0
    %137 = vmatprep.subr.bf16.mxu0 0
    %138 = vmatpush2.bf16.msra.mxu0 0
    %139 = vmatprep.subr.bf16.mxu0 0
    %140 = vmatpush2.bf16.msra.mxu0 0
    %141 = vmatprep.subr.bf16.mxu0 0
    %142 = vmatpush2.bf16.msra.mxu0 0
    %143 = vmatprep.mubr.bf16.mxu0 0
    %144 = vmatmul.mubr.bf16.gmra.mxu0 %v109
    %v145 = vpop.f32.mrf.mxu0
    %v146 = vadd.f32 0.0, %v145
    %v147 = vpop.f32.mrf.mxu0
    %v148 = vpop.f32.mrf.mxu0
    %v149 = vadd.f32 0.0, %v148
    %v150 = vpop.f32.mrf.mxu0
    %151 = vdwg.mxu0
    %v152 = vpack.c.bf16 %v149, %v146
    %s153 = scalar_lea.vmem %s2, 16
    %v154 = vld [vmem:[%s153] sm:$0xf]
    %v155 = vld [vmem:[%s153 + $0x4] sm:$0xf]
    %v156 = vld [vmem:[%s153 + $0x8] sm:$0xf]
    %v157 = vld [vmem:[%s153 + $0xc] sm:$0xf]
    %v162 = vunpack.c.l.b16 %v154
    %v163 = vunpack.c.l.b16 %v155
    %v164 = vunpack.c.l.b16 %v156
    %v165 = vunpack.c.l.b16 %v157
    %v166 = vpack.c.b16 %v163, %v162
    %v167 = vpack.c.b16 %v165, %v164
    %170 = vmatprep.subr.bf16.mxu0 0
    %171 = vmatpush1.bf16.msra.mxu0 0
    %172 = vmatprep.subr.bf16.mxu0 0
    %173 = vmatpush1.bf16.msra.mxu0 0
    %174 = vmatprep.subr.bf16.mxu0 0
    %175 = vmatpush1.bf16.msra.mxu0 0
    %176 = vmatprep.subr.bf16.mxu0 0
    %177 = vmatpush1.bf16.msra.mxu0 0
    %178 = vmatprep.subr.bf16.mxu0 0
    %179 = vmatpush1.bf16.msra.mxu0 0
    %180 = vmatprep.subr.bf16.mxu0 0
    %181 = vmatpush1.bf16.msra.mxu0 0
    %182 = vmatprep.subr.bf16.mxu0 0
    %183 = vmatpush1.bf16.msra.mxu0 %v167
    %184 = vmatprep.subr.bf16.mxu0 0
    %185 = vmatpush1.bf16.msra.mxu0 %v166
    %186 = vmatprep.subr.bf16.mxu0 0
    %187 = vmatpush2.bf16.msra.mxu0 0
    %188 = vmatprep.subr.bf16.mxu0 0
    %189 = vmatpush2.bf16.msra.mxu0 0
    %190 = vmatprep.subr.bf16.mxu0 0
    %191 = vmatpush2.bf16.msra.mxu0 0
    %192 = vmatprep.subr.bf16.mxu0 0
    %193 = vmatpush2.bf16.msra.mxu0 0
    %194 = vmatprep.subr.bf16.mxu0 0
    %195 = vmatpush2.bf16.msra.mxu0 0
    %196 = vmatprep.subr.bf16.mxu0 0
    %197 = vmatpush2.bf16.msra.mxu0 0
    %198 = vmatprep.subr.bf16.mxu0 0
    %199 = vmatpush2.bf16.msra.mxu0 0
    %200 = vmatprep.subr.bf16.mxu0 0
    %201 = vmatpush2.bf16.msra.mxu0 0
    %202 = vmatprep.mubr.bf16.mxu0 0
    %203 = vmatmul.mubr.bf16.gmra.mxu0 %v109
    %v204 = vpop.f32.mrf.mxu0
    %v205 = vadd.f32 0.0, %v204
    %v206 = vpop.f32.mrf.mxu0
    %v207 = vpop.f32.mrf.mxu0
    %v208 = vadd.f32 0.0, %v207
    %v209 = vpop.f32.mrf.mxu0
    %210 = vdwg.mxu0
    %v211 = vpack.c.bf16 %v208, %v205
    %s212 = scalar_lea.vmem %s2, 32
    %v213 = vld [vmem:[%s212] sm:$0xf]
    %v214 = vld [vmem:[%s212 + $0x4] sm:$0xf]
    %v215 = vld [vmem:[%s212 + $0x8] sm:$0xf]
    %v216 = vld [vmem:[%s212 + $0xc] sm:$0xf]
    %v221 = vunpack.c.l.b16 %v213
    %v222 = vunpack.c.l.b16 %v214
    %v223 = vunpack.c.l.b16 %v215
    %v224 = vunpack.c.l.b16 %v216
    %v225 = vpack.c.b16 %v222, %v221
    %v226 = vpack.c.b16 %v224, %v223
    %229 = vmatprep.subr.bf16.mxu0 0
    %230 = vmatpush1.bf16.msra.mxu0 0
    %231 = vmatprep.subr.bf16.mxu0 0
    %232 = vmatpush1.bf16.msra.mxu0 0
    %233 = vmatprep.subr.bf16.mxu0 0
    %234 = vmatpush1.bf16.msra.mxu0 0
    %235 = vmatprep.subr.bf16.mxu0 0
    %236 = vmatpush1.bf16.msra.mxu0 0
    %237 = vmatprep.subr.bf16.mxu0 0
    %238 = vmatpush1.bf16.msra.mxu0 0
    %239 = vmatprep.subr.bf16.mxu0 0
    %240 = vmatpush1.bf16.msra.mxu0 0
    %241 = vmatprep.subr.bf16.mxu0 0
    %242 = vmatpush1.bf16.msra.mxu0 %v226
    %243 = vmatprep.subr.bf16.mxu0 0
    %244 = vmatpush1.bf16.msra.mxu0 %v225
    %245 = vmatprep.subr.bf16.mxu0 0
    %246 = vmatpush2.bf16.msra.mxu0 0
    %247 = vmatprep.subr.bf16.mxu0 0
    %248 = vmatpush2.bf16.msra.mxu0 0
    %249 = vmatprep.subr.bf16.mxu0 0
    %250 = vmatpush2.bf16.msra.mxu0 0
    %251 = vmatprep.subr.bf16.mxu0 0
    %252 = vmatpush2.bf16.msra.mxu0 0
    %253 = vmatprep.subr.bf16.mxu0 0
    %254 = vmatpush2.bf16.msra.mxu0 0
    %255 = vmatprep.subr.bf16.mxu0 0
    %256 = vmatpush2.bf16.msra.mxu0 0
    %257 = vmatprep.subr.bf16.mxu0 0
    %258 = vmatpush2.bf16.msra.mxu0 0
    %259 = vmatprep.subr.bf16.mxu0 0
    %260 = vmatpush2.bf16.msra.mxu0 0
    %261 = vmatprep.mubr.bf16.mxu0 0
    %262 = vmatmul.mubr.bf16.gmra.mxu0 %v109
    %v263 = vpop.f32.mrf.mxu0
    %v264 = vadd.f32 0.0, %v263
    %v265 = vpop.f32.mrf.mxu0
    %v266 = vpop.f32.mrf.mxu0
    %v267 = vadd.f32 0.0, %v266
    %v268 = vpop.f32.mrf.mxu0
    %269 = vdwg.mxu0
    %v270 = vpack.c.bf16 %v267, %v264
    %v271 = vld [vmem:[%s1] sm:$0x3]
    %v272 = vlaneseq
    %v273 = vshrl.u32 %v272, 7
    %v274 = vsub.s32 0, %v273
    %v275 = vrot.slane %v271, %v274
    %v277 = vsel %vm107, %v152, 0
    %v280 = vsel %vm107, %v211, 0
    %282 = vmatprep.subr.bf16.mxu0 0
    %283 = vmatpush1.bf16.xpose.msra.mxu0 0
    %284 = vmatprep.subr.bf16.mxu0 0
    %285 = vmatpush1.bf16.xpose.msra.mxu0 0
    %286 = vmatprep.subr.bf16.mxu0 0
    %287 = vmatpush1.bf16.xpose.msra.mxu0 0
    %288 = vmatprep.subr.bf16.mxu0 0
    %289 = vmatpush1.bf16.xpose.msra.mxu0 0
    %290 = vmatprep.subr.bf16.mxu0 0
    %291 = vmatpush1.bf16.xpose.msra.mxu0 0
    %292 = vmatprep.subr.bf16.mxu0 0
    %293 = vmatpush1.bf16.xpose.msra.mxu0 0
    %294 = vmatprep.subr.bf16.mxu0 0
    %295 = vmatpush1.bf16.xpose.msra.mxu0 0
    %296 = vmatprep.subr.bf16.mxu0 0
    %297 = vmatpush1.bf16.xpose.msra.mxu0 %v280
    %298 = vmatprep.subr.bf16.mxu0 0
    %299 = vmatpush2.bf16.xpose.msra.mxu0 0
    %300 = vmatprep.subr.bf16.mxu0 0
    %301 = vmatpush2.bf16.xpose.msra.mxu0 0
    %302 = vmatprep.subr.bf16.mxu0 0
    %303 = vmatpush2.bf16.xpose.msra.mxu0 0
    %304 = vmatprep.subr.bf16.mxu0 0
    %305 = vmatpush2.bf16.xpose.msra.mxu0 0
    %306 = vmatprep.subr.bf16.mxu0 0
    %307 = vmatpush2.bf16.xpose.msra.mxu0 0
    %308 = vmatprep.subr.bf16.mxu0 0
    %309 = vmatpush2.bf16.xpose.msra.mxu0 0
    %310 = vmatprep.subr.bf16.mxu0 0
    %311 = vmatpush2.bf16.xpose.msra.mxu0 0
    %312 = vmatprep.subr.bf16.mxu0 0
    %313 = vmatpush2.bf16.xpose.msra.mxu0 0
    %314 = vmatprep.mubr.bf16.mxu0 0
    %315 = vmatmul.mubr.bf16.gmra.mxu0 %v277
    %v316 = vpop.f32.mrf.mxu0
    %v317 = vadd.f32 %v275, %v316
    %v318 = vpop.f32.mrf.mxu0
    %v319 = vpop.f32.mrf.mxu0
    %v320 = vpop.f32.mrf.mxu0
    %321 = vdwg.mxu0
    %vm322 = vcmask 64512
    %v323 = vsel %vm322, %v317, -inf
    %324 = vmax.xlane.f32.xlu0 %v323
    %v325 = vpop.xlane.xlu0 %324
    %v326 = vsub.f32 %v317, %v325
    %v327 = vpack.c.bf16 %v326, %v326
    %v329 = vmul.bf16 %v327, 1069105081
    %v330 = vpow.bf16.pop %v329
    %v331 = vunpack.c.l.bf16 %v330
    %v332 = vsel %vm322, %v331, 0.0
    %333 = vadd.xlane.f32.xlu0 %v332
    %v334 = vpop.xlane.xlu0 %333
    %v336 = vsel %vm322, %v330, 0
    %vm338 = vcmask 1043456
    %v340 = vsel %vm338, %v270, 0
    %342 = vmatprep.subr.bf16.mxu0 0
    %343 = vmatpush1.bf16.msra.mxu0 0
    %344 = vmatprep.subr.bf16.mxu0 0
    %345 = vmatpush1.bf16.msra.mxu0 0
    %346 = vmatprep.subr.bf16.mxu0 0
    %347 = vmatpush1.bf16.msra.mxu0 0
    %348 = vmatprep.subr.bf16.mxu0 0
    %349 = vmatpush1.bf16.msra.mxu0 0
    %350 = vmatprep.subr.bf16.mxu0 0
    %351 = vmatpush1.bf16.msra.mxu0 0
    %352 = vmatprep.subr.bf16.mxu0 0
    %353 = vmatpush1.bf16.msra.mxu0 0
    %354 = vmatprep.subr.bf16.mxu0 0
    %355 = vmatpush1.bf16.msra.mxu0 0
    %356 = vmatprep.subr.bf16.mxu0 0
    %357 = vmatpush1.bf16.msra.mxu0 %v340
    %358 = vmatprep.subr.bf16.mxu0 0
    %359 = vmatpush2.bf16.msra.mxu0 0
    %360 = vmatprep.subr.bf16.mxu0 0
    %361 = vmatpush2.bf16.msra.mxu0 0
    %362 = vmatprep.subr.bf16.mxu0 0
    %363 = vmatpush2.bf16.msra.mxu0 0
    %364 = vmatprep.subr.bf16.mxu0 0
    %365 = vmatpush2.bf16.msra.mxu0 0
    %366 = vmatprep.subr.bf16.mxu0 0
    %367 = vmatpush2.bf16.msra.mxu0 0
    %368 = vmatprep.subr.bf16.mxu0 0
    %369 = vmatpush2.bf16.msra.mxu0 0
    %370 = vmatprep.subr.bf16.mxu0 0
    %371 = vmatpush2.bf16.msra.mxu0 0
    %372 = vmatprep.subr.bf16.mxu0 0
    %373 = vmatpush2.bf16.msra.mxu0 0
    %374 = vmatprep.mubr.bf16.mxu0 0
    %375 = vmatmul.mubr.bf16.gmra.mxu0 %v336
    %v376 = vpop.f32.mrf.mxu0
    %v377 = vadd.f32 0.0, %v376
    %v378 = vpop.f32.mrf.mxu0
    %v379 = vpop.f32.mrf.mxu0
    %v380 = vpop.f32.mrf.mxu0
    %381 = vdwg.mxu0
    %v382 = vrcp.pop %v334
    %v383 = vmul.f32 %v377, %v382
    %v384 = vlaneseq
    %v385 = vshrl.u32 %v384, 7
    %v386 = vsub.s32 1, %v385
    %v387 = vrot.slane %v271, %v386
    %v389 = vrot.slane %v152, 4
    %v391 = vrot.slane %v211, 4
    %v393 = vsel %vm107, %v389, 0
    %v396 = vsel %vm107, %v391, 0
    %398 = vmatprep.subr.bf16.mxu0 0
    %399 = vmatpush1.bf16.xpose.msra.mxu0 0
    %400 = vmatprep.subr.bf16.mxu0 0
    %401 = vmatpush1.bf16.xpose.msra.mxu0 0
    %402 = vmatprep.subr.bf16.mxu0 0
    %403 = vmatpush1.bf16.xpose.msra.mxu0 0
    %404 = vmatprep.subr.bf16.mxu0 0
    %405 = vmatpush1.bf16.xpose.msra.mxu0 0
    %406 = vmatprep.subr.bf16.mxu0 0
    %407 = vmatpush1.bf16.xpose.msra.mxu0 0
    %408 = vmatprep.subr.bf16.mxu0 0
    %409 = vmatpush1.bf16.xpose.msra.mxu0 0
    %410 = vmatprep.subr.bf16.mxu0 0
    %411 = vmatpush1.bf16.xpose.msra.mxu0 0
    %412 = vmatprep.subr.bf16.mxu0 0
    %413 = vmatpush1.bf16.xpose.msra.mxu0 %v396
    %414 = vmatprep.subr.bf16.mxu0 0
    %415 = vmatpush2.bf16.xpose.msra.mxu0 0
    %416 = vmatprep.subr.bf16.mxu0 0
    %417 = vmatpush2.bf16.xpose.msra.mxu0 0
    %418 = vmatprep.subr.bf16.mxu0 0
    %419 = vmatpush2.bf16.xpose.msra.mxu0 0
    %420 = vmatprep.subr.bf16.mxu0 0
    %421 = vmatpush2.bf16.xpose.msra.mxu0 0
    %422 = vmatprep.subr.bf16.mxu0 0
    %423 = vmatpush2.bf16.xpose.msra.mxu0 0
    %424 = vmatprep.subr.bf16.mxu0 0
    %425 = vmatpush2.bf16.xpose.msra.mxu0 0
    %426 = vmatprep.subr.bf16.mxu0 0
    %427 = vmatpush2.bf16.xpose.msra.mxu0 0
    %428 = vmatprep.subr.bf16.mxu0 0
    %429 = vmatpush2.bf16.xpose.msra.mxu0 0
    %430 = vmatprep.mubr.bf16.mxu0 0
    %431 = vmatmul.mubr.bf16.gmra.mxu0 %v393
    %v432 = vpop.f32.mrf.mxu0
    %v433 = vadd.f32 %v387, %v432
    %v434 = vpop.f32.mrf.mxu0
    %v435 = vpop.f32.mrf.mxu0
    %v436 = vpop.f32.mrf.mxu0
    %437 = vdwg.mxu0
    %v438 = vsel %vm322, %v433, -inf
    %439 = vmax.xlane.f32.xlu0 %v438
    %v440 = vpop.xlane.xlu0 %439
    %v441 = vsub.f32 %v433, %v440
    %v442 = vpack.c.bf16 %v441, %v441
    %v444 = vmul.bf16 %v442, 1069105081
    %v445 = vpow.bf16.pop %v444
    %v446 = vunpack.c.l.bf16 %v445
    %v447 = vsel %vm322, %v446, 0.0
    %448 = vadd.xlane.f32.xlu0 %v447
    %v449 = vpop.xlane.xlu0 %448
    %v451 = vrot.slane %v270, 4
    %v453 = vsel %vm322, %v445, 0
    %v456 = vsel %vm338, %v451, 0
    %458 = vmatprep.subr.bf16.mxu0 0
    %459 = vmatpush1.bf16.msra.mxu0 0
    %460 = vmatprep.subr.bf16.mxu0 0
    %461 = vmatpush1.bf16.msra.mxu0 0
    %462 = vmatprep.subr.bf16.mxu0 0
    %463 = vmatpush1.bf16.msra.mxu0 0
    %464 = vmatprep.subr.bf16.mxu0 0
    %465 = vmatpush1.bf16.msra.mxu0 0
    %466 = vmatprep.subr.bf16.mxu0 0
    %467 = vmatpush1.bf16.msra.mxu0 0
    %468 = vmatprep.subr.bf16.mxu0 0
    %469 = vmatpush1.bf16.msra.mxu0 0
    %470 = vmatprep.subr.bf16.mxu0 0
    %471 = vmatpush1.bf16.msra.mxu0 0
    %472 = vmatprep.subr.bf16.mxu0 0
    %473 = vmatpush1.bf16.msra.mxu0 %v456
    %474 = vmatprep.subr.bf16.mxu0 0
    %475 = vmatpush2.bf16.msra.mxu0 0
    %476 = vmatprep.subr.bf16.mxu0 0
    %477 = vmatpush2.bf16.msra.mxu0 0
    %478 = vmatprep.subr.bf16.mxu0 0
    %479 = vmatpush2.bf16.msra.mxu0 0
    %480 = vmatprep.subr.bf16.mxu0 0
    %481 = vmatpush2.bf16.msra.mxu0 0
    %482 = vmatprep.subr.bf16.mxu0 0
    %483 = vmatpush2.bf16.msra.mxu0 0
    %484 = vmatprep.subr.bf16.mxu0 0
    %485 = vmatpush2.bf16.msra.mxu0 0
    %486 = vmatprep.subr.bf16.mxu0 0
    %487 = vmatpush2.bf16.msra.mxu0 0
    %488 = vmatprep.subr.bf16.mxu0 0
    %489 = vmatpush2.bf16.msra.mxu0 0
    %490 = vmatprep.mubr.bf16.mxu0 0
    %491 = vmatmul.mubr.bf16.gmra.mxu0 %v453
    %v492 = vpop.f32.mrf.mxu0
    %v493 = vadd.f32 0.0, %v492
    %v494 = vpop.f32.mrf.mxu0
    %v495 = vpop.f32.mrf.mxu0
    %v496 = vpop.f32.mrf.mxu0
    %497 = vdwg.mxu0
    %v498 = vrcp.pop %v449
    %v499 = vmul.f32 %v493, %v498
    %v500 = vpack.c.bf16 %v499, %v383
    %v501 = vld [vmem:[#allocation5] sm:$0xf]
    %v502 = vld [vmem:[#allocation5 + $0x4] sm:$0xf]
    %v503 = vld [vmem:[#allocation5 + $0x8] sm:$0xf]
    %v504 = vld [vmem:[#allocation5 + $0xc] sm:$0xf]
    %v509 = vunpack.c.l.b16 %v501
    %v510 = vunpack.c.l.b16 %v502
    %v511 = vunpack.c.l.b16 %v503
    %v512 = vunpack.c.l.b16 %v504
    %v513 = vpack.c.b16 %v510, %v509
    %v514 = vpack.c.b16 %v512, %v511
    %v518 = vsel %vm107, %v500, 0
    %520 = vmatprep.subr.bf16.mxu0 0
    %521 = vmatpush1.bf16.msra.mxu0 0
    %522 = vmatprep.subr.bf16.mxu0 0
    %523 = vmatpush1.bf16.msra.mxu0 0
    %524 = vmatprep.subr.bf16.mxu0 0
    %525 = vmatpush1.bf16.msra.mxu0 0
    %526 = vmatprep.subr.bf16.mxu0 0
    %527 = vmatpush1.bf16.msra.mxu0 0
    %528 = vmatprep.subr.bf16.mxu0 0
    %529 = vmatpush1.bf16.msra.mxu0 0
    %530 = vmatprep.subr.bf16.mxu0 0
    %531 = vmatpush1.bf16.msra.mxu0 0
    %532 = vmatprep.subr.bf16.mxu0 0
    %533 = vmatpush1.bf16.msra.mxu0 %v514
    %534 = vmatprep.subr.bf16.mxu0 0
    %535 = vmatpush1.bf16.msra.mxu0 %v513
    %536 = vmatprep.subr.bf16.mxu0 0
    %537 = vmatpush2.bf16.msra.mxu0 0
    %538 = vmatprep.subr.bf16.mxu0 0
    %539 = vmatpush2.bf16.msra.mxu0 0
    %540 = vmatprep.subr.bf16.mxu0 0
    %541 = vmatpush2.bf16.msra.mxu0 0
    %542 = vmatprep.subr.bf16.mxu0 0
    %543 = vmatpush2.bf16.msra.mxu0 0
    %544 = vmatprep.subr.bf16.mxu0 0
    %545 = vmatpush2.bf16.msra.mxu0 0
    %546 = vmatprep.subr.bf16.mxu0 0
    %547 = vmatpush2.bf16.msra.mxu0 0
    %548 = vmatprep.subr.bf16.mxu0 0
    %549 = vmatpush2.bf16.msra.mxu0 0
    %550 = vmatprep.subr.bf16.mxu0 0
    %551 = vmatpush2.bf16.msra.mxu0 0
    %552 = vmatprep.mubr.bf16.mxu0 0
    %553 = vmatmul.mubr.bf16.gmra.mxu0 %v518
    %v554 = vpop.f32.mrf.mxu0
    %v555 = vadd.f32 0.0, %v554
    %v556 = vpop.f32.mrf.mxu0
    %v557 = vpop.f32.mrf.mxu0
    %v558 = vadd.f32 0.0, %v557
    %v559 = vpop.f32.mrf.mxu0
    %560 = vdwg.mxu0
    %v561 = vadd.f32 %v88, %v555
    %v562 = vadd.f32 %v89, %v558
    %v563 = vld [vmem:[%s4] sm:$0x1]
    %v564 = vld [vmem:[%s5] sm:$0x1]
    %v565 = vsel %vm107, %v561, 0.0
    %566 = vadd.xlane.f32.xlu0 %v565
    %v567 = vpop.xlane.xlu0 %566
    %v568 = vsel %vm107, %v562, 0.0
    %569 = vadd.xlane.f32.xlu0 %v568
    %v570 = vpop.xlane.xlu0 %569
    %v571 = vrcp.pop 32.0
    %v572 = vmul.f32 %v567, %v571
    %v573 = vmul.f32 %v570, %v571
    %v574 = vsub.f32 %v561, %v572
    %v575 = vsub.f32 %v562, %v573
    %v576 = vmul.f32 %v574, %v574
    %v577 = vmul.f32 %v575, %v575
    %v578 = vsel %vm107, %v576, 0.0
    %579 = vadd.xlane.f32.xlu0 %v578
    %v580 = vpop.xlane.xlu0 %579
    %v581 = vsel %vm107, %v577, 0.0
    %582 = vadd.xlane.f32.xlu0 %v581
    %v583 = vpop.xlane.xlu0 %582
    %v584 = vmul.f32 %v580, %v571
    %v585 = vmul.f32 %v583, %v571
    %v586 = vadd.f32 %v584, 1e-12
    %v587 = vadd.f32 %v585, 1e-12
    %v588 = vrsqrt.pop %v586
    %v589 = vrsqrt.pop %v587
    %v590 = vmul.f32 %v574, %v588
    %v591 = vmul.f32 %v575, %v589
    %v593 = vlaneseq
    %v594 = vshrl.u32 %v593, 7
    %v595 = vsub.s32 0, %v594
    %v596 = vrot.slane %v563, %v595
    %v598 = vmul.f32 %v590, %v596
    %v599 = vmul.f32 %v591, %v596
    %v601 = vlaneseq
    %v602 = vshrl.u32 %v601, 7
    %v603 = vsub.s32 0, %v602
    %v604 = vrot.slane %v564, %v603
    %v606 = vadd.f32 %v598, %v604
    %v607 = vadd.f32 %v599, %v604
    %v608 = vpack.c.bf16 %v607, %v606
    %v609 = vld [vmem:[#allocation7] sm:$0xf]
    %v610 = vld [vmem:[#allocation7 + $0x4] sm:$0xf]
    %v611 = vld [vmem:[#allocation7 + $0x8] sm:$0xf]
    %v612 = vld [vmem:[#allocation7 + $0xc] sm:$0xf]
    %v613 = vld [vmem:[%s7] sm:$0x1]
    %v615 = vlaneseq
    %v616 = vshrl.u32 %v615, 7
    %v617 = vsub.s32 0, %v616
    %v618 = vrot.slane %v613, %v617
    %v624 = vunpack.c.l.b16 %v609
    %v625 = vunpack.c.l.b16 %v610
    %v626 = vunpack.c.l.b16 %v611
    %v627 = vunpack.c.l.b16 %v612
    %v628 = vpack.c.b16 %v625, %v624
    %v629 = vpack.c.b16 %v627, %v626
    %v633 = vsel %vm107, %v608, 0
    %635 = vmatprep.subr.bf16.mxu0 0
    %636 = vmatpush1.bf16.msra.mxu0 0
    %637 = vmatprep.subr.bf16.mxu0 0
    %638 = vmatpush1.bf16.msra.mxu0 0
    %639 = vmatprep.subr.bf16.mxu0 0
    %640 = vmatpush1.bf16.msra.mxu0 0
    %641 = vmatprep.subr.bf16.mxu0 0
    %642 = vmatpush1.bf16.msra.mxu0 0
    %643 = vmatprep.subr.bf16.mxu0 0
    %644 = vmatpush1.bf16.msra.mxu0 0
    %645 = vmatprep.subr.bf16.mxu0 0
    %646 = vmatpush1.bf16.msra.mxu0 0
    %647 = vmatprep.subr.bf16.mxu0 0
    %648 = vmatpush1.bf16.msra.mxu0 %v629
    %649 = vmatprep.subr.bf16.mxu0 0
    %650 = vmatpush1.bf16.msra.mxu0 %v628
    %651 = vmatprep.subr.bf16.mxu0 0
    %652 = vmatpush2.bf16.msra.mxu0 0
    %653 = vmatprep.subr.bf16.mxu0 0
    %654 = vmatpush2.bf16.msra.mxu0 0
    %655 = vmatprep.subr.bf16.mxu0 0
    %656 = vmatpush2.bf16.msra.mxu0 0
    %657 = vmatprep.subr.bf16.mxu0 0
    %658 = vmatpush2.bf16.msra.mxu0 0
    %659 = vmatprep.subr.bf16.mxu0 0
    %660 = vmatpush2.bf16.msra.mxu0 0
    %661 = vmatprep.subr.bf16.mxu0 0
    %662 = vmatpush2.bf16.msra.mxu0 0
    %663 = vmatprep.subr.bf16.mxu0 0
    %664 = vmatpush2.bf16.msra.mxu0 0
    %665 = vmatprep.subr.bf16.mxu0 0
    %666 = vmatpush2.bf16.msra.mxu0 0
    %667 = vmatprep.mubr.bf16.mxu0 0
    %668 = vmatmul.mubr.bf16.gmra.mxu0 %v633
    %v669 = vpop.f32.mrf.mxu0
    %v670 = vadd.f32 %v618, %v669
    %v671 = vpop.f32.mrf.mxu0
    %v672 = vpop.f32.mrf.mxu0
    %v673 = vadd.f32 %v618, %v672
    %v674 = vpop.f32.mrf.mxu0
    %675 = vdwg.mxu0
    %v676 = vpack.c.bf16 %v673, %v670
    %v677 = vmul.bf16 %v676, %v676
    %v678 = vmul.bf16 %v676, %v677
    %v679 = vmul.bf16 %v678, 1027030327
    %v680 = vadd.bf16 %v676, %v679
    %v681 = vmul.bf16 %v680, 1061961548
    %v682 = vtanh.bf16.pop %v681
    %v683 = vadd.bf16 %v682, 1065369472
    %v684 = vmul.bf16 %v683, 1056980736
    %v685 = vmul.bf16 %v676, %v684
    %v686 = vld [vmem:[%s8] sm:$0xf]
    %v687 = vld [vmem:[%s8 + $0x4] sm:$0xf]
    %v688 = vld [vmem:[%s8 + $0x8] sm:$0xf]
    %v689 = vld [vmem:[%s8 + $0xc] sm:$0xf]
    %v690 = vld [vmem:[%s8 + $0x10] sm:$0xf]
    %v691 = vld [vmem:[%s8 + $0x14] sm:$0xf]
    %v692 = vld [vmem:[%s8 + $0x18] sm:$0xf]
    %v693 = vld [vmem:[%s8 + $0x1c] sm:$0xf]
    %v694 = vld [vmem:[%s9] sm:$0x1]
    %v696 = vlaneseq
    %v697 = vshrl.u32 %v696, 7
    %v698 = vsub.s32 0, %v697
    %v699 = vrot.slane %v694, %v698
    %v709 = vunpack.c.l.b16 %v686
    %v710 = vunpack.c.l.b16 %v687
    %v711 = vunpack.c.l.b16 %v688
    %v712 = vunpack.c.l.b16 %v689
    %v713 = vunpack.c.l.b16 %v690
    %v714 = vunpack.c.l.b16 %v691
    %v715 = vunpack.c.l.b16 %v692
    %v716 = vunpack.c.l.b16 %v693
    %v717 = vpack.c.b16 %v710, %v709
    %v718 = vpack.c.b16 %v712, %v711
    %v719 = vpack.c.b16 %v714, %v713
    %v720 = vpack.c.b16 %v716, %v715
    %vm725 = vcmask 523264
    %v727 = vsel %vm725, %v685, 0
    %729 = vmatprep.subr.bf16.mxu0 0
    %730 = vmatpush1.bf16.msra.mxu0 0
    %731 = vmatprep.subr.bf16.mxu0 0
    %732 = vmatpush1.bf16.msra.mxu0 0
    %733 = vmatprep.subr.bf16.mxu0 0
    %734 = vmatpush1.bf16.msra.mxu0 0
    %735 = vmatprep.subr.bf16.mxu0 0
    %736 = vmatpush1.bf16.msra.mxu0 0
    %737 = vmatprep.subr.bf16.mxu0 0
    %738 = vmatpush1.bf16.msra.mxu0 %v720
    %739 = vmatprep.subr.bf16.mxu0 0
    %740 = vmatpush1.bf16.msra.mxu0 %v719
    %741 = vmatprep.subr.bf16.mxu0 0
    %742 = vmatpush1.bf16.msra.mxu0 %v718
    %743 = vmatprep.subr.bf16.mxu0 0
    %744 = vmatpush1.bf16.msra.mxu0 %v717
    %745 = vmatprep.subr.bf16.mxu0 0
    %746 = vmatpush2.bf16.msra.mxu0 0
    %747 = vmatprep.subr.bf16.mxu0 0
    %748 = vmatpush2.bf16.msra.mxu0 0
    %749 = vmatprep.subr.bf16.mxu0 0
    %750 = vmatpush2.bf16.msra.mxu0 0
    %751 = vmatprep.subr.bf16.mxu0 0
    %752 = vmatpush2.bf16.msra.mxu0 0
    %753 = vmatprep.subr.bf16.mxu0 0
    %754 = vmatpush2.bf16.msra.mxu0 0
    %755 = vmatprep.subr.bf16.mxu0 0
    %756 = vmatpush2.bf16.msra.mxu0 0
    %757 = vmatprep.subr.bf16.mxu0 0
    %758 = vmatpush2.bf16.msra.mxu0 0
    %759 = vmatprep.subr.bf16.mxu0 0
    %760 = vmatpush2.bf16.msra.mxu0 0
    %761 = vmatprep.mubr.bf16.mxu0 0
    %762 = vmatmul.mubr.bf16.gmra.mxu0 %v727
    %v763 = vpop.f32.mrf.mxu0
    %v764 = vadd.f32 %v699, %v763
    %v765 = vpop.f32.mrf.mxu0
    %v766 = vpop.f32.mrf.mxu0
    %v767 = vadd.f32 %v699, %v766
    %v768 = vpop.f32.mrf.mxu0
    %769 = vdwg.mxu0
    %v770 = vadd.f32 %v606, %v764
    %v771 = vadd.f32 %v607, %v767
    %v772 = vld [vmem:[%s10] sm:$0x1]
    %v773 = vld [vmem:[%s11] sm:$0x1]
    %v774 = vsel %vm107, %v770, 0.0
    %775 = vadd.xlane.f32.xlu0 %v774
    %v776 = vpop.xlane.xlu0 %775
    %v777 = vsel %vm107, %v771, 0.0
    %778 = vadd.xlane.f32.xlu0 %v777
    %v779 = vpop.xlane.xlu0 %778
    %v780 = vmul.f32 %v776, %v571
    %v781 = vmul.f32 %v779, %v571
    %v782 = vsub.f32 %v770, %v780
    %v783 = vsub.f32 %v771, %v781
    %v784 = vmul.f32 %v782, %v782
    %v785 = vmul.f32 %v783, %v783
    %v786 = vsel %vm107, %v784, 0.0
    %787 = vadd.xlane.f32.xlu0 %v786
    %v788 = vpop.xlane.xlu0 %787
    %v789 = vsel %vm107, %v785, 0.0
    %790 = vadd.xlane.f32.xlu0 %v789
    %v791 = vpop.xlane.xlu0 %790
    %v792 = vmul.f32 %v788, %v571
    %v793 = vmul.f32 %v791, %v571
    %v794 = vadd.f32 %v792, 1e-12
    %v795 = vadd.f32 %v793, 1e-12
    %v796 = vrsqrt.pop %v794
    %v797 = vrsqrt.pop %v795
    %v798 = vmul.f32 %v782, %v796
    %v799 = vmul.f32 %v783, %v797
    %v801 = vlaneseq
    %v802 = vshrl.u32 %v801, 7
    %v803 = vsub.s32 0, %v802
    %v804 = vrot.slane %v772, %v803
    %v806 = vmul.f32 %v798, %v804
    %v807 = vmul.f32 %v799, %v804
    %v809 = vlaneseq
    %v810 = vshrl.u32 %v809, 7
    %v811 = vsub.s32 0, %v810
    %v812 = vrot.slane %v773, %v811
    %v814 = vadd.f32 %v806, %v812
    %v815 = vadd.f32 %v807, %v812
    %816 = vst.msk [vmem:[#allocation8] sm:$0xff] %vm107, %v814
    %817 = vst.msk [vmem:[#allocation8 + $0x8] sm:$0xff] %vm107, %v815
    // Predicated region
    $region62: #{tpu_custom_call.1} parent=1 // pred_check
      _
    $region63: #{tpu_custom_call.1} parent=1 // pred_check_branch
      %819 = sbr.rel (0) target = $region65
    $region64: #{tpu_custom_call.1} parent=1 // pred_region
      %s821 = ssub.s32 256, 256
      %822 = vsyncadd [#allocation4], %s821
      %s823 = sshll.u32 [#allocation8], 4
      %s824 = int_to_ptr.vmem [resolvable:$true] %s823
      %829 = dma.vmem_to_hbm [thread:$0]  %s824, 256, %s12, [#allocation4], 128, 128, 8
    $region65: #{tpu_custom_call.1} parent=1 // pred_fallthru
      _
    // Predicated region
    $region66: #{tpu_custom_call.1} parent=1 // pred_check
      _
    $region67: #{tpu_custom_call.1} parent=1 // pred_check_branch
      %831 = sbr.rel (0) target = $region69
    $region68: #{tpu_custom_call.1} parent=1 // pred_region
      %832 = dma.done [#allocation4], 256
    $region69: #{tpu_custom_call.1} parent=1 // pred_fallthru
      _
    %833 = vsyncpa [#allocation3], 1
    %834 = vsyncpa [#allocation6], 1
    %835 = vsyncpa [#allocation4], 1

</llo_original>
